<compile_context>
chip_gen: v6e
topology: v6e:2x2x1
jax: 0.10.0
libtpu: 0.0.40
codegen_flags: <defaults>
</compile_context>

<pallas_src>
import jax
import jax.numpy as jnp
from jax.experimental import pallas as pl
from jax.experimental.pallas import tpu as pltpu

IN_F, HID, OUT_F = 2, 2, 1
LANE = 128


def _round_up(x, m):
    return ((x + m - 1) // m) * m


def mlp_kernel(x_ref, w1_ref, w2_ref, o_ref):
    # x_ref : (IN_F, TB) VMEM, batch on lanes (lane-dense).
    # w1_ref: (4,) SMEM  -> [w00, w01, w10, w11]   (row-major W1)
    # w2_ref: (2,) SMEM  -> [w2_0, w2_1]
    # o_ref : (1, TB) VMEM, lane-dense output slab.
    x0 = x_ref[0:1, :]                                        # (1, TB)
    x1 = x_ref[1:2, :]                                        # (1, TB)
    h0 = jnp.maximum(x0 * w1_ref[0] + x1 * w1_ref[1], 0.0)    # relu(x @ W1.T)[:, 0]
    h1 = jnp.maximum(x0 * w1_ref[2] + x1 * w1_ref[3], 0.0)    # relu(x @ W1.T)[:, 1]
    o_ref[...] = h0 * w2_ref[0] + h1 * w2_ref[1]              # h @ w2


def test_network_forward(state, w1, w2, block_b=32768):
    """state: (B, 2); w1: (2, 2); w2: (2,). Returns (B,) like the PyTorch module."""
    B = state.shape[0]

    # Pick a lane-aligned batch tile and pad the batch up to a whole number of tiles.
    B_P = _round_up(B, LANE)
    tb = min(_round_up(block_b, LANE), B_P)
    B_P = _round_up(B_P, tb)
    grid = (B_P // tb,)

    # Glue (plain JAX): present the input feature-major so batch is lane-dense.
    # Padded lanes are zero -> relu(0)=0 -> they contribute nothing and are sliced off.
    x_fm = jnp.zeros((IN_F, B_P), jnp.float32).at[:, :B].set(
        state.astype(jnp.float32).T)
    w1_flat = w1.astype(jnp.float32).reshape(-1)   # (4,)
    w2_flat = w2.astype(jnp.float32).reshape(-1)   # (2,)

    out_p = pl.pallas_call(
        mlp_kernel,
        out_shape=jax.ShapeDtypeStruct((1, B_P), jnp.float32),
        grid=grid,
        in_specs=[
            pl.BlockSpec((IN_F, tb), lambda i: (0, i)),                 # x tile (VMEM)
            pl.BlockSpec(memory_space=pltpu.MemorySpace.SMEM),          # W1 scalars
            pl.BlockSpec(memory_space=pltpu.MemorySpace.SMEM),          # w2 scalars
        ],
        out_specs=pl.BlockSpec((1, tb), lambda i: (0, i)),
        compiler_params=pltpu.CompilerParams(
            dimension_semantics=("parallel",)),
    )(x_fm, w1_flat, w2_flat)

    # PyTorch F.linear with a 1-D weight collapses the feature dim -> (B,)
    return out_p[0, :B]


if __name__ == "__main__":
    key = jax.random.PRNGKey(0)
    B = 8
    state = jax.random.normal(key, (B, IN_F), dtype=jnp.float32)

    # Deterministic parameters exactly as in TestNetwork.__init__
    w1 = jnp.array([[2.0, 3.0], [1.0, 1.0]], dtype=jnp.float32)  # Linear(2,2).weight
    w2 = jnp.array([1.0, -1.0], dtype=jnp.float32)               # Linear(2,1).weight (1-D)

    out = test_network_forward(state, w1, w2)
    out = jax.block_until_ready(out)

    # Pure-JAX reference (same semantics as the PyTorch module).
    ref = jnp.maximum(state @ w1.T, 0.0) @ w2
    assert out.shape == (B,), out.shape
    assert jnp.allclose(out, ref, atol=1e-5, rtol=1e-5), (out, ref)

    print("KERNEL_OK")
</pallas_src>

<mosaic_0001>
module attributes {stable_mosaic.version = 11 : i64} {
  func.func @mlp_kernel(%arg0: i32, %arg1: memref<2x128xf32, #tpu.memory_space<vmem>>, %arg2: memref<4xf32, #tpu.memory_space<smem>>, %arg3: memref<2xf32, #tpu.memory_space<smem>>, %arg4: memref<1x128xf32, #tpu.memory_space<vmem>>) attributes {dimension_semantics = [#tpu.dimension_semantics<parallel>], iteration_bounds = array<i64: 1>, scalar_prefetch = 0 : i64, scratch_operands = 0 : i64, tpu.core_type = #tpu.core_type<tc>, window_params = [{transform_indices = @transform_0, window_bounds = array<i64: 2, 128>}, {transform_indices = @transform_1, window_bounds = array<i64: 4>}, {transform_indices = @transform_2, window_bounds = array<i64: 2>}, {transform_indices = @transform_3, window_bounds = array<i64: 1, 128>}]} {
    %c0 = arith.constant 0 : index
    %c0_0 = arith.constant 0 : index
    %0 = vector.load %arg1[%c0, %c0_0] : memref<2x128xf32, #tpu.memory_space<vmem>>, vector<1x128xf32>
    %c1 = arith.constant 1 : index
    %c0_1 = arith.constant 0 : index
    %1 = vector.load %arg1[%c1, %c0_1] : memref<2x128xf32, #tpu.memory_space<vmem>>, vector<1x128xf32>
    %c0_2 = arith.constant 0 : index
    %2 = memref.load %arg2[%c0_2] : memref<4xf32, #tpu.memory_space<smem>>
    %3 = vector.broadcast %2 : f32 to vector<1x128xf32>
    %4 = arith.mulf %0, %3 : vector<1x128xf32>
    %c1_3 = arith.constant 1 : index
    %5 = memref.load %arg2[%c1_3] : memref<4xf32, #tpu.memory_space<smem>>
    %6 = vector.broadcast %5 : f32 to vector<1x128xf32>
    %7 = arith.mulf %1, %6 : vector<1x128xf32>
    %8 = arith.addf %4, %7 : vector<1x128xf32>
    %cst = arith.constant 0.000000e+00 : f32
    %9 = vector.broadcast %cst : f32 to vector<1x128xf32>
    %10 = arith.maximumf %8, %9 : vector<1x128xf32>
    %c2 = arith.constant 2 : index
    %11 = memref.load %arg2[%c2] : memref<4xf32, #tpu.memory_space<smem>>
    %12 = vector.broadcast %11 : f32 to vector<1x128xf32>
    %13 = arith.mulf %0, %12 : vector<1x128xf32>
    %c3 = arith.constant 3 : index
    %14 = memref.load %arg2[%c3] : memref<4xf32, #tpu.memory_space<smem>>
    %15 = vector.broadcast %14 : f32 to vector<1x128xf32>
    %16 = arith.mulf %1, %15 : vector<1x128xf32>
    %17 = arith.addf %13, %16 : vector<1x128xf32>
    %cst_4 = arith.constant 0.000000e+00 : f32
    %18 = vector.broadcast %cst_4 : f32 to vector<1x128xf32>
    %19 = arith.maximumf %17, %18 : vector<1x128xf32>
    %c0_5 = arith.constant 0 : index
    %20 = memref.load %arg3[%c0_5] : memref<2xf32, #tpu.memory_space<smem>>
    %21 = vector.broadcast %20 : f32 to vector<1x128xf32>
    %22 = arith.mulf %10, %21 : vector<1x128xf32>
    %c1_6 = arith.constant 1 : index
    %23 = memref.load %arg3[%c1_6] : memref<2xf32, #tpu.memory_space<smem>>
    %24 = vector.broadcast %23 : f32 to vector<1x128xf32>
    %25 = arith.mulf %19, %24 : vector<1x128xf32>
    %26 = arith.addf %22, %25 : vector<1x128xf32>
    %c0_7 = arith.constant 0 : index
    %c0_8 = arith.constant 0 : index
    %27 = vector.load %arg4[%c0_7, %c0_8] : memref<1x128xf32, #tpu.memory_space<vmem>>, vector<1x128xf32>
    tpu.vector_store %arg4[%c0_7, %c0_8], %26 {strides = array<i32>} : memref<1x128xf32, #tpu.memory_space<vmem>>, vector<1x128xf32>,
    return
  }
  func.func @transform_0(%arg0: i32) -> (i32, i32) {
    %c0_i32 = arith.constant 0 : i32
    %c0_i32_0 = arith.constant 0 : i32
    return %c0_i32, %arg0 : i32, i32
  }
  func.func @transform_1(%arg0: i32) -> i32 {
    %c0_i32 = arith.constant 0 : i32
    %c0_i32_0 = arith.constant 0 : i32
    return %c0_i32 : i32
  }
  func.func @transform_2(%arg0: i32) -> i32 {
    %c0_i32 = arith.constant 0 : i32
    %c0_i32_0 = arith.constant 0 : i32
    return %c0_i32 : i32
  }
  func.func @transform_3(%arg0: i32) -> (i32, i32) {
    %c0_i32 = arith.constant 0 : i32
    %c0_i32_0 = arith.constant 0 : i32
    return %c0_i32, %arg0 : i32, i32
  }
}

</mosaic_0001>

<llo_original>
// kernel: tpu_custom_call.1
$region0: #{tpu_custom_call.1}
  #allocation0 [shape = 'u32[]', space=smem, size = 0x4, offset = 0x4, fixed_abs, tag = 'smem constant byte address 0x4 - core index']
  #allocation1 [shape = 'u32[144,128]{1,0:T(1,128)}', space=vmem, size = 0x12000, scoped, tag = 'internal scratch']
  %s0 = inlined_call_operand.hbm [shape: f32[2,128], index: 0, kind: input, shape index: {}]
  %s1 = inlined_call_operand.vmem [shape: f32[4], index: 1, kind: input, shape index: {}]
  %s2 = inlined_call_operand.vmem [shape: f32[2], index: 2, kind: input, shape index: {}]
  %s3 = inlined_call_operand.hbm [shape: f32[1,128], index: 3, kind: output, shape index: {}]
  %s4 = sld [smem:[#allocation0]]
  $region34: #{tpu_custom_call.1} parent=0
    _
  %s6 = ssub.s32 1, %s4
  %s7 = scalar_select 0, %s6, %s4
  $region1: #{tpu_custom_call.1} parent=0
    #allocation2 [shape = 'u8[1024]{0}', space=vmem, size = 0x400, scoped, tag = 'input window, operand 0, single buffered']
    #allocation3 [shape = 's32[1]{0}', space=sflag, size = 0x4, scoped, tag = 'scoped memory for tpu_custom_call.1']
    #allocation4 [shape = 's32[1]{0}', space=sflag, size = 0x4, scoped, tag = 'scoped memory for tpu_custom_call.1']
    #allocation5 [shape = 's32[1]{0}', space=sflag, size = 0x4, scoped, tag = 'scoped memory for tpu_custom_call.1']
    #allocation6 [shape = 'u8[512]{0}', space=smem, size = 0x200, scoped, tag = 'input window, operand 1, single buffered']
    #allocation7 [shape = 'u8[512]{0}', space=smem, size = 0x200, scoped, tag = 'input window, operand 2, single buffered']
    #allocation8 [shape = 's32[1]{0}', space=sflag, size = 0x4, scoped, tag = 'scoped memory for tpu_custom_call.1']
    #allocation9 [shape = 'u8[512]{0}', space=vmem, size = 0x400, scoped, tag = 'output window, operand 0, single buffered']
    %8 = vsyncpa [#allocation3], 0
    %9 = vsyncpa [#allocation5], 0
    %10 = vsyncpa [#allocation8], 0
    %11 = vsyncpa [#allocation4], 0
    // Predicated region
    $region2: #{tpu_custom_call.1} parent=1 // pred_check
      _
    $region3: #{tpu_custom_call.1} parent=1 // pred_check_branch
      %13 = sbr.rel (0) target = $region5
    $region4: #{tpu_custom_call.1} parent=1 // pred_region
      %s15 = ssub.s32 32, 32
      %16 = vsyncadd [#allocation3], %s15
      %s18 = sshll.u32 [#allocation2], 4
      %s19 = int_to_ptr.vmem [resolvable:$true] %s18
      %21 = dma.hbm_to_vmem [thread:$0]  %s0, 32, %s19, [#allocation3]
    $region5: #{tpu_custom_call.1} parent=1 // pred_fallthru
      _
    // Predicated region
    $region6: #{tpu_custom_call.1} parent=1 // pred_check
      _
    $region7: #{tpu_custom_call.1} parent=1 // pred_check_branch
      %23 = sbr.rel (0) target = $region9
    $region8: #{tpu_custom_call.1} parent=1 // pred_region
      %s25 = ssub.s32 16, 16
      %26 = vsyncadd [#allocation5], %s25
      %s28 = sshll.u32 %s1, 4
      %s29 = int_to_ptr.vmem [resolvable:$true] %s28
      %31 = dma.vmem_to_smem %s29, 16, [#allocation6], [#allocation5]
    $region9: #{tpu_custom_call.1} parent=1 // pred_fallthru
      _
    // Predicated region
    $region10: #{tpu_custom_call.1} parent=1 // pred_check
      _
    $region11: #{tpu_custom_call.1} parent=1 // pred_check_branch
      %33 = sbr.rel (0) target = $region13
    $region12: #{tpu_custom_call.1} parent=1 // pred_region
      %s35 = ssub.s32 16, 16
      %36 = vsyncadd [#allocation8], %s35
      %s38 = sshll.u32 %s2, 4
      %s39 = int_to_ptr.vmem [resolvable:$true] %s38
      %41 = dma.vmem_to_smem %s39, 16, [#allocation7], [#allocation8]
    $region13: #{tpu_custom_call.1} parent=1 // pred_fallthru
      _
    // Predicated region
    $region14: #{tpu_custom_call.1} parent=1 // pred_check
      _
    $region15: #{tpu_custom_call.1} parent=1 // pred_check_branch
      %43 = sbr.rel (0) target = $region17
    $region16: #{tpu_custom_call.1} parent=1 // pred_region
      %44 = dma.done [#allocation3], 32
    $region17: #{tpu_custom_call.1} parent=1 // pred_fallthru
      _
    // Predicated region
    $region18: #{tpu_custom_call.1} parent=1 // pred_check
      _
    $region19: #{tpu_custom_call.1} parent=1 // pred_check_branch
      %46 = sbr.rel (0) target = $region21
    $region20: #{tpu_custom_call.1} parent=1 // pred_region
      %47 = dma.done [#allocation5], 16
    $region21: #{tpu_custom_call.1} parent=1 // pred_fallthru
      _
    // Predicated region
    $region22: #{tpu_custom_call.1} parent=1 // pred_check
      _
    $region23: #{tpu_custom_call.1} parent=1 // pred_check_branch
      %49 = sbr.rel (0) target = $region25
    $region24: #{tpu_custom_call.1} parent=1 // pred_region
      %50 = dma.done [#allocation8], 16
    $region25: #{tpu_custom_call.1} parent=1 // pred_fallthru
      _
    %51 = sfence
    %v52 = vld [vmem:[#allocation2] sm:$0x1]
    %v53 = vld [vmem:[#allocation2 + $0x1] sm:$0x1]
    %s54 = sld [smem:[#allocation6]]
    %v55 = vstv %s54
    %v56 = vmul.f32 %v52, %v55
    %s57 = sld [smem:[#allocation6 + $0x1]]
    %v58 = vstv %s57
    %v59 = vmul.f32 %v53, %v58
    %v60 = vadd.f32 %v56, %v59
    %v61 = vmax.f32 %v60, 0.0
    %s62 = sld [smem:[#allocation6 + $0x2]]
    %v63 = vstv %s62
    %v64 = vmul.f32 %v52, %v63
    %s65 = sld [smem:[#allocation6 + $0x3]]
    %v66 = vstv %s65
    %v67 = vmul.f32 %v53, %v66
    %v68 = vadd.f32 %v64, %v67
    %v69 = vmax.f32 %v68, 0.0
    %s70 = sld [smem:[#allocation7]]
    %v71 = vstv %s70
    %v72 = vmul.f32 %v61, %v71
    %s73 = sld [smem:[#allocation7 + $0x1]]
    %v74 = vstv %s73
    %v75 = vmul.f32 %v69, %v74
    %v76 = vadd.f32 %v72, %v75
    %77 = vst [vmem:[#allocation9] sm:$0x1] %v76
    // Predicated region
    $region26: #{tpu_custom_call.1} parent=1 // pred_check
      _
    $region27: #{tpu_custom_call.1} parent=1 // pred_check_branch
      %79 = sbr.rel (0) target = $region29
    $region28: #{tpu_custom_call.1} parent=1 // pred_region
      %s81 = ssub.s32 16, 16
      %82 = vsyncadd [#allocation4], %s81
      %s84 = sshll.u32 [#allocation9], 4
      %s85 = int_to_ptr.vmem [resolvable:$true] %s84
      %87 = dma.vmem_to_hbm [thread:$0]  %s85, 16, %s3, [#allocation4]
    $region29: #{tpu_custom_call.1} parent=1 // pred_fallthru
      _
    // Predicated region
    $region30: #{tpu_custom_call.1} parent=1 // pred_check
      _
    $region31: #{tpu_custom_call.1} parent=1 // pred_check_branch
      %89 = sbr.rel (0) target = $region33
    $region32: #{tpu_custom_call.1} parent=1 // pred_region
      %90 = dma.done [#allocation4], 16
    $region33: #{tpu_custom_call.1} parent=1 // pred_fallthru
      _
    %91 = vsyncpa [#allocation3], 1
    %92 = vsyncpa [#allocation4], 1
    %93 = vsyncpa [#allocation5], 1
    %94 = vsyncpa [#allocation8], 1

</llo_original>
